<compile_context>
chip_gen: v5e
topology: v5e:2x2
jax: 0.10.0
libtpu: 0.0.40
codegen_flags: <defaults>
</compile_context>

<pallas_src>
import functools

import jax
import jax.numpy as jnp
from jax.experimental import pallas as pl
from jax.experimental.pallas import tpu as pltpu


def _round_up(x, m):
    return (x + m - 1) // m * m


def _depth_norm_kernel(z_ref, o_ref, *, scale):
    # Single VPU multiply in the input's native dtype.  `scale` is a Python
    # float folded at trace time -> no SMEM operand, no extra DMA.
    o_ref[...] = (z_ref[...] * scale).astype(o_ref.dtype)


def _choose_tiling(B, N, itemsize):
    """Pick (blk_b, blk_n, grid_b, grid_n) for the (B, N) slab."""
    # Row block: full B when small (full-dim blocks are exempt from the
    # sublane-multiple rule), else 128 rows (multiple of both 8 (f32) and
    # 16 (bf16) sublane packs); ragged last row-block is masked by Pallas.
    blk_b = B if B <= 128 else 128
    grid_b = pl.cdiv(B, blk_b)

    # Lane block: multiple of 128, <= ~1 MiB per block (so double-buffered
    # in+out stays <= ~4 MiB on every generation), capped so we get >= ~4
    # grid steps when N is large enough for the pipeline to overlap DMA.
    target_bytes = 1 << 20
    blk_n = max(128, (target_bytes // max(1, blk_b * itemsize)) // 128 * 128)
    blk_n = min(blk_n, _round_up(pl.cdiv(N, 4), 128))
    if blk_n >= N:
        # Single full-width block (full array dim is exempt from the 128 rule).
        return blk_b, N, grid_b, 1

    grid_n = pl.cdiv(N, blk_n)
    # v7x: prefer an even step count on the parallel axis so both TensorCores
    # get equal work (no-op on v5e/v6e).
    if grid_n > 1 and grid_n % 2 == 1:
        cand = _round_up(pl.cdiv(N, grid_n + 1), 128)
        if 128 <= cand < N and pl.cdiv(N, cand) % 2 == 0:
            blk_n = cand
            grid_n = pl.cdiv(N, blk_n)
    return blk_b, blk_n, grid_b, grid_n


def depth_normalizer(z, *, load_size=512, z_size=200.0,
                     min_kernel_elements=256 * 1024):
    """Pallas port of PiFU DepthNormalizer.forward: z * (load_size // 2) / z_size.

    z: [B, 1, N] float array.  Returns an array of the same shape and dtype.
    """
    B, C, N = z.shape
    assert C == 1, "DepthNormalizer expects a singleton channel dim"
    scale = float(load_size // 2) / float(z_size)

    # Small-input fast path: XLA fuses the scalar multiply for free; a
    # pallas_call dispatch would cost far more than the data movement.
    # TODO(synk): in a full PiFU pipeline, fuse this scale into the consumer.
    if B * N < min_kernel_elements:
        return (z * scale).astype(z.dtype)

    # Squeeze the singleton channel dim (metadata-only reshape, no HBM pass)
    # and run the kernel directly on the (B, N) slab with a cdiv grid; Pallas
    # masks the ragged last block, so there is no pad before / slice after.
    z2d = z.reshape(B, N)
    blk_b, blk_n, grid_b, grid_n = _choose_tiling(B, N, z.dtype.itemsize)

    out2d = pl.pallas_call(
        functools.partial(_depth_norm_kernel, scale=scale),
        out_shape=jax.ShapeDtypeStruct((B, N), z.dtype),
        grid=(grid_b, grid_n),
        in_specs=[pl.BlockSpec((blk_b, blk_n), lambda i, j: (i, j))],
        out_specs=pl.BlockSpec((blk_b, blk_n), lambda i, j: (i, j)),
        compiler_params=pltpu.CompilerParams(
            # Pure elementwise op: both axes independent -> megacore sharding.
            dimension_semantics=("parallel", "parallel"),
        ),
    )(z2d)

    return out2d.reshape(B, 1, N)


if __name__ == "__main__":
    load_size, z_size = 512, 200.0
    scale = (load_size // 2) / z_size

    # 1) Small [B, 1, N] case (takes the fused fast path).
    B, N = 2, 256
    z = jax.random.normal(jax.random.PRNGKey(0), (B, 1, N), dtype=jnp.float32) * 100.0
    out = jax.block_until_ready(depth_normalizer(z, load_size=load_size, z_size=z_size))
    ref = z * (load_size // 2) / z_size
    assert out.shape == (B, 1, N)
    assert out.dtype == z.dtype
    assert jnp.allclose(out, ref, rtol=1e-6, atol=1e-6)

    # 2) Medium f32 case: exercises the tiled Pallas path
    #    (ragged last block masked, 4-step even grid, no pad / no slice).
    B2, N2 = 4, 100_000
    z2 = jax.random.normal(jax.random.PRNGKey(1), (B2, 1, N2), dtype=jnp.float32)
    out2 = jax.block_until_ready(depth_normalizer(z2, load_size=load_size, z_size=z_size))
    ref2 = z2 * (load_size // 2) / z_size
    assert out2.shape == (B2, 1, N2)
    assert out2.dtype == z2.dtype
    assert jnp.allclose(out2, ref2, rtol=1e-6, atol=1e-6)

    # 3) Medium bf16 case: native-bf16 multiply inside the kernel.
    z3 = jax.random.normal(jax.random.PRNGKey(2), (B2, 1, N2), dtype=jnp.bfloat16)
    out3 = jax.block_until_ready(depth_normalizer(z3, load_size=load_size, z_size=z_size))
    ref3 = (z3.astype(jnp.float32) * scale).astype(jnp.bfloat16)
    assert out3.shape == (B2, 1, N2)
    assert out3.dtype == jnp.bfloat16
    assert jnp.allclose(out3.astype(jnp.float32), ref3.astype(jnp.float32),
                        rtol=2e-2, atol=2e-2)

    print("KERNEL_OK")
</pallas_src>

<mosaic_0001>
module attributes {stable_mosaic.version = 11 : i64} {
  func.func @_depth_norm_kernel(%arg0: i32, %arg1: i32, %arg2: memref<4x25088xf32, #tpu.memory_space<vmem>>, %arg3: memref<4x25088xf32, #tpu.memory_space<vmem>>) attributes {dimension_semantics = [#tpu.dimension_semantics<parallel>, #tpu.dimension_semantics<parallel>], iteration_bounds = array<i64: 1, 4>, scalar_prefetch = 0 : i64, scratch_operands = 0 : i64, tpu.core_type = #tpu.core_type<tc>, window_params = [{transform_indices = @transform_0, window_bounds = array<i64: 4, 25088>}, {transform_indices = @transform_1, window_bounds = array<i64: 4, 25088>}]} {
    %c0 = arith.constant 0 : index
    %c0_0 = arith.constant 0 : index
    %0 = vector.load %arg2[%c0, %c0_0] : memref<4x25088xf32, #tpu.memory_space<vmem>>, vector<4x25088xf32>
    %cst = arith.constant 1.280000e+00 : f32
    %1 = vector.broadcast %cst : f32 to vector<4x25088xf32>
    %2 = arith.mulf %0, %1 : vector<4x25088xf32>
    %c0_1 = arith.constant 0 : index
    %c0_2 = arith.constant 0 : index
    %3 = vector.load %arg3[%c0_1, %c0_2] : memref<4x25088xf32, #tpu.memory_space<vmem>>, vector<4x25088xf32>
    tpu.vector_store %arg3[%c0_1, %c0_2], %2 {strides = array<i32>} : memref<4x25088xf32, #tpu.memory_space<vmem>>, vector<4x25088xf32>,
    return
  }
  func.func @transform_0(%arg0: i32, %arg1: i32) -> (i32, i32) {
    %c0_i32 = arith.constant 0 : i32
    return %arg0, %arg1 : i32, i32
  }
  func.func @transform_1(%arg0: i32, %arg1: i32) -> (i32, i32) {
    %c0_i32 = arith.constant 0 : i32
    return %arg0, %arg1 : i32, i32
  }
}

</mosaic_0001>

<llo_original>
// kernel: tpu_custom_call.1
$region0: #{tpu_custom_call.1}
  #allocation0 [shape = 'u32[]', space=smem, size = 0x4, offset = 0x4, fixed_abs, tag = 'smem constant byte address 0x4 - core index']
  #allocation1 [shape = 'u32[72,128]{1,0:T(1,128)}', space=vmem, size = 0x9000, scoped, tag = 'internal scratch']
  %s0 = inlined_call_operand.hbm [shape: f32[4,100000], index: 0, kind: input, shape index: {}]
  %s1 = inlined_call_operand.hbm [shape: f32[4,100000], index: 1, kind: output, shape index: {}]
  %s2 = sld [smem:[#allocation0]]
  $region41: #{tpu_custom_call.1} parent=0
    _
  %s4 = ssub.s32 1, %s2
  %s5 = scalar_select 0, %s4, %s2
  $region1: #{tpu_custom_call.1} parent=0
    #allocation2 [shape = 'u8[802816]{0}', space=vmem, size = 0xc4000, scoped, tag = 'input window, operand 0']
    #allocation3 [shape = 's32[2]{0}', space=sflag, size = 0x8, scoped, tag = 'scoped memory for tpu_custom_call.1']
    #allocation4 [shape = 's32[2]{0}', space=sflag, size = 0x8, scoped, tag = 'scoped memory for tpu_custom_call.1']
    #allocation5 [shape = 'u8[802816]{0}', space=vmem, size = 0xc4000, scoped, tag = 'output window, operand 0']
    %6 = vsyncpa [#allocation3], 0
    %s7 = scalar_lea.sflag [#allocation3], 1
    %8 = vsyncpa %s7, 0
    %9 = vsyncpa [#allocation4], 0
    %s10 = scalar_lea.sflag [#allocation4], 1
    %11 = vsyncpa %s10, 0
    loop: start=0, step=1, limit=6
    $region2: #{tpu_custom_call.1} parent=1 // loop_pre_header
      _
    $region3: #{tpu_custom_call.1} parent=1 // loop_header
      %s13 = sphi 0, %s17
      %p14 = scmp.ge.s32.totalorder %s13, 6
      %s20 = sphi 0, %s32
      %s21 = sphi 0, %s28
      %s22 = sphi 0, %s20
      %s23 = sphi 0, %s21
      %s24 = sphi 0, %s22
      %s25 = sphi 0, %s23
      %s37 = sphi 0, %s39
      %s40 = sphi 0, %s37
      %s41 = sphi 0, %s40
      %s57 = sphi 0, %s41
      %s65 = sphi 0, %s67
      %s68 = sphi 0, %s65
      %s69 = sphi 0, %s68
      %s85 = sphi 0, %s69
    $region4: #{tpu_custom_call.1} parent=1 // loop_header_branch
      %16 = sbr.rel (%p14) target = $region8
    $region5: #{tpu_custom_call.1} parent=1 // loop_body
      %s18 = ssub.s32 %s13, 1
      %s19 = ssub.s32 %s13, 2
      %s26 = sadd.s32 1, %s21
      %p27 = scmp.ge.s32.totalorder %s26, 4
      %s28 = scalar_select %p27, 0, %s26
      %s29 = sadd.s32 1, %s20
      %s30 = scalar_select %p27, %s29, %s20
      %p31 = scmp.ge.s32.totalorder %s30, 1
      %s32 = scalar_select %p31, 0, %s30
      %s33 = ssub.s32 %s20, %s32
      %s34 = ssub.s32 %s21, %s28
      %s35 = sor.u32 %s33, %s34
      %p36 = scmp.eq.s32.totalorder %s35, 0
      %s38 = sadd.s32 %s37, 1
      %s39 = scalar_select %p36, %s37, %s38
      %p42 = pneg %p36
      %p43 = scmp.eq.s32.totalorder %s13, 3
      %p44 = por %p42, %p43
      %p45 = scmp.ne.s32.totalorder %s37, %s40
      %p46 = scmp.eq.s32.totalorder %s13, 0
      %p47 = por %p45, %p46
      %p48 = scmp.ne.s32.totalorder %s37, %s40
      %p49 = scmp.eq.s32.totalorder %s18, 3
      %p50 = por %p48, %p49
      %p51 = scmp.ne.s32.totalorder %s40, %s41
      %p52 = scmp.eq.s32.totalorder %s18, 0
      %p53 = por %p51, %p52
      %p54 = scmp.ne.s32.totalorder %s40, %s41
      %p55 = scmp.eq.s32.totalorder %s19, 3
      %p56 = por %p54, %p55
      %p58 = scmp.ne.s32.totalorder %s41, %s57
      %p59 = scmp.eq.s32.totalorder %s19, 0
      %p60 = por %p58, %p59
      %s61 = ssub.s32 %s20, %s32
      %s62 = ssub.s32 %s21, %s28
      %s63 = sor.u32 %s61, %s62
      %p64 = scmp.eq.s32.totalorder %s63, 0
      %s66 = sadd.s32 %s65, 1
      %s67 = scalar_select %p64, %s65, %s66
      %p70 = pneg %p64
      %p71 = scmp.eq.s32.totalorder %s13, 3
      %p72 = por %p70, %p71
      %p73 = scmp.ne.s32.totalorder %s65, %s68
      %p74 = scmp.eq.s32.totalorder %s13, 0
      %p75 = por %p73, %p74
      %p76 = scmp.ne.s32.totalorder %s65, %s68
      %p77 = scmp.eq.s32.totalorder %s18, 3
      %p78 = por %p76, %p77
      %p79 = scmp.ne.s32.totalorder %s68, %s69
      %p80 = scmp.eq.s32.totalorder %s18, 0
      %p81 = por %p79, %p80
      %p82 = scmp.ne.s32.totalorder %s68, %s69
      %p83 = scmp.eq.s32.totalorder %s19, 3
      %p84 = por %p82, %p83
      %p86 = scmp.ne.s32.totalorder %s69, %s85
      %p87 = scmp.eq.s32.totalorder %s19, 0
      %p88 = por %p86, %p87
      %p89 = scmp.le.s32.totalorder 1, %s13
      %p90 = scmp.lt.s32.totalorder %s13, 5
      %p91 = pnand %p89, %p90
      %p92 = pneg %p91
      // Predicated region
      $region9: #{tpu_custom_call.1} parent=5 // pred_check
        _
      $region10: #{tpu_custom_call.1} parent=5 // pred_check_branch
        %94 = sbr.rel (%p91) target = $region12
      $region11: #{tpu_custom_call.1} parent=5 // pred_region
        %s95 = ssub.s32 %s13, 1
      $region12: #{tpu_custom_call.1} parent=5 // pred_fallthru
        _
      %p96 = scmp.lt.s32.totalorder %s13, 4
      // Predicated region
      $region13: #{tpu_custom_call.1} parent=5 // pred_check
        %p97 = pneg %p96
      $region14: #{tpu_custom_call.1} parent=5 // pred_check_branch
        %99 = sbr.rel (%p97) target = $region16
      $region15: #{tpu_custom_call.1} parent=5 // pred_region
        // Predicated region
        $region17: #{tpu_custom_call.1} parent=15 // pred_check
          %p100 = pneg %p47
        $region18: #{tpu_custom_call.1} parent=15 // pred_check_branch
          %102 = sbr.rel (%p100) target = $region20
        $region19: #{tpu_custom_call.1} parent=15 // pred_region
          %s103 = sand.u32 %s37, 1
          %s104 = scalar_lea.sflag [#allocation3], %s103
          %s105 = sand.u32 %s37, 1
          %s106 = smul.addr %s105, 784
          %s107 = scalar_lea.vmem [#allocation2], %s106
          %s108 = smul.u32 196, %s21
          %s109 = ssub.s32 782, %s108
          %p110 = scmp.lt.s32.totalorder %s109, 196
          %s111 = scalar_select %p110, %s109, 196
          %s112 = smul.u32 4, %s111
          %s113 = ssub.s32 784, %s112
          %s114 = sshll.u32 %s113, 4
          %115 = vsyncadd %s104, %s114
          %p116 = scmp.ne.s32.totalorder 0, %s112
          %s117 = smul.addr %s20, 782
          %s118 = sadd.s32 %s108, %s117
          %s119 = smul.addr %s118, 4
          %s120 = scalar_lea.hbm %s0, %s119
          %s121 = smul.u32 %s111, 4
          %s122 = sshll.u32 %s121, 4
          %s123 = sshll.u32 %s120, 4
          %s124 = int_to_ptr.hbm [resolvable:$true] %s123
          %s125 = sshll.u32 %s107, 4
          %s126 = int_to_ptr.vmem [resolvable:$true] %s125
          %128 = dma.hbm_to_vmem [thread:$0]  (%p116), %s124, %s122, %s126, %s104
        $region20: #{tpu_custom_call.1} parent=15 // pred_fallthru
          _
      $region16: #{tpu_custom_call.1} parent=5 // pred_fallthru
        _
      %p129 = scmp.le.s32.totalorder 1, %s13
      %p130 = scmp.lt.s32.totalorder %s13, 5
      %p131 = pnand %p129, %p130
      %p132 = pneg %p131
      // Predicated region
      $region21: #{tpu_custom_call.1} parent=5 // pred_check
        _
      $region22: #{tpu_custom_call.1} parent=5 // pred_check_branch
        %134 = sbr.rel (%p131) target = $region24
      $region23: #{tpu_custom_call.1} parent=5 // pred_region
        %s135 = ssub.s32 %s13, 1
        %s136 = sand.u32 %s40, 1
        %s137 = scalar_lea.sflag [#allocation3], %s136
        %s138 = sand.u32 %s40, 1
        %s139 = smul.addr %s138, 784
        %s140 = scalar_lea.vmem [#allocation2], %s139
        // Predicated region
        $region25: #{tpu_custom_call.1} parent=23 // pred_check
          %p141 = pneg %p53
        $region26: #{tpu_custom_call.1} parent=23 // pred_check_branch
          %143 = sbr.rel (%p141) target = $region28
        $region27: #{tpu_custom_call.1} parent=23 // pred_region
          %145 = dma.done %s137, 12544
        $region28: #{tpu_custom_call.1} parent=23 // pred_fallthru
          _
        %s146 = sand.u32 %s40, 1
        %s147 = scalar_lea.sflag [#allocation3], %s146
        %s148 = sand.u32 %s40, 1
        %s149 = smul.addr %s148, 784
        %s150 = scalar_lea.vmem [#allocation2], %s149
        %p151 = pneg %p53
        %p152 = pneg %p50
        %p153 = pneg %p81
        %p154 = pneg %p78
        %s155 = sand.u32 %s68, 1
        %s156 = scalar_lea.sflag [#allocation4], %s155
        %s157 = sand.u32 %s68, 1
        %s158 = smul.addr %s157, 784
        %s159 = scalar_lea.vmem [#allocation5], %s158
        %s160 = smul.u32 196, %s23
        %s161 = ssub.s32 782, %s160
        %p162 = scmp.lt.s32.totalorder %s161, 196
        %s163 = scalar_select %p162, %s161, 196
        %s164 = smul.u32 4, %s163
        %s165 = smul.u32 196, %s23
        %s166 = ssub.s32 782, %s165
        %p167 = scmp.lt.s32.totalorder %s166, 196
        %s168 = scalar_select %p167, %s166, 196
        %s169 = smul.u32 4, %s168
        %v170 = vld [vmem:[%s140] sm:$0xff]
        %v171 = vld [vmem:[%s140 + $0x8] sm:$0xff]
        %v172 = vld [vmem:[%s140 + $0x10] sm:$0xff]
        %v173 = vld [vmem:[%s140 + $0x18] sm:$0xff]
        %v174 = vld [vmem:[%s140 + $0x20] sm:$0xff]
        %v175 = vld [vmem:[%s140 + $0x28] sm:$0xff]
        %v176 = vld [vmem:[%s140 + $0x30] sm:$0xff]
        %v177 = vld [vmem:[%s140 + $0x38] sm:$0xff]
        %v178 = vld [vmem:[%s140 + $0x40] sm:$0xff]
        %v179 = vld [vmem:[%s140 + $0x48] sm:$0xff]
        %v180 = vld [vmem:[%s140 + $0x50] sm:$0xff]
        %v181 = vld [vmem:[%s140 + $0x58] sm:$0xff]
        %v182 = vld [vmem:[%s140 + $0x60] sm:$0xff]
        %v183 = vld [vmem:[%s140 + $0x68] sm:$0xff]
        %v184 = vld [vmem:[%s140 + $0x70] sm:$0xff]
        %v185 = vld [vmem:[%s140 + $0x78] sm:$0xff]
        %v186 = vld [vmem:[%s140 + $0x80] sm:$0xff]
        %v187 = vld [vmem:[%s140 + $0x88] sm:$0xff]
        %v188 = vld [vmem:[%s140 + $0x90] sm:$0xff]
        %v189 = vld [vmem:[%s140 + $0x98] sm:$0xff]
        %v190 = vld [vmem:[%s140 + $0xa0] sm:$0xff]
        %v191 = vld [vmem:[%s140 + $0xa8] sm:$0xff]
        %v192 = vld [vmem:[%s140 + $0xb0] sm:$0xff]
        %v193 = vld [vmem:[%s140 + $0xb8] sm:$0xff]
        %v194 = vld [vmem:[%s140 + $0xc0] sm:$0xff]
        %v195 = vld [vmem:[%s140 + $0xc8] sm:$0xff]
        %v196 = vld [vmem:[%s140 + $0xd0] sm:$0xff]
        %v197 = vld [vmem:[%s140 + $0xd8] sm:$0xff]
        %v198 = vld [vmem:[%s140 + $0xe0] sm:$0xff]
        %v199 = vld [vmem:[%s140 + $0xe8] sm:$0xff]
        %v200 = vld [vmem:[%s140 + $0xf0] sm:$0xff]
        %v201 = vld [vmem:[%s140 + $0xf8] sm:$0xff]
        %v202 = vld [vmem:[%s140 + $0x100] sm:$0xff]
        %v203 = vld [vmem:[%s140 + $0x108] sm:$0xff]
        %v204 = vld [vmem:[%s140 + $0x110] sm:$0xff]
        %v205 = vld [vmem:[%s140 + $0x118] sm:$0xff]
        %v206 = vld [vmem:[%s140 + $0x120] sm:$0xff]
        %v207 = vld [vmem:[%s140 + $0x128] sm:$0xff]
        %v208 = vld [vmem:[%s140 + $0x130] sm:$0xff]
        %v209 = vld [vmem:[%s140 + $0x138] sm:$0xff]
        %v210 = vld [vmem:[%s140 + $0x140] sm:$0xff]
        %v211 = vld [vmem:[%s140 + $0x148] sm:$0xff]
        %v212 = vld [vmem:[%s140 + $0x150] sm:$0xff]
        %v213 = vld [vmem:[%s140 + $0x158] sm:$0xff]
        %v214 = vld [vmem:[%s140 + $0x160] sm:$0xff]
        %v215 = vld [vmem:[%s140 + $0x168] sm:$0xff]
        %v216 = vld [vmem:[%s140 + $0x170] sm:$0xff]
        %v217 = vld [vmem:[%s140 + $0x178] sm:$0xff]
        %v218 = vld [vmem:[%s140 + $0x180] sm:$0xff]
        %v219 = vld [vmem:[%s140 + $0x188] sm:$0xff]
        %v220 = vld [vmem:[%s140 + $0x190] sm:$0xff]
        %v221 = vld [vmem:[%s140 + $0x198] sm:$0xff]
        %v222 = vld [vmem:[%s140 + $0x1a0] sm:$0xff]
        %v223 = vld [vmem:[%s140 + $0x1a8] sm:$0xff]
        %v224 = vld [vmem:[%s140 + $0x1b0] sm:$0xff]
        %v225 = vld [vmem:[%s140 + $0x1b8] sm:$0xff]
        %v226 = vld [vmem:[%s140 + $0x1c0] sm:$0xff]
        %v227 = vld [vmem:[%s140 + $0x1c8] sm:$0xff]
        %v228 = vld [vmem:[%s140 + $0x1d0] sm:$0xff]
        %v229 = vld [vmem:[%s140 + $0x1d8] sm:$0xff]
        %v230 = vld [vmem:[%s140 + $0x1e0] sm:$0xff]
        %v231 = vld [vmem:[%s140 + $0x1e8] sm:$0xff]
        %v232 = vld [vmem:[%s140 + $0x1f0] sm:$0xff]
        %v233 = vld [vmem:[%s140 + $0x1f8] sm:$0xff]
        %v234 = vld [vmem:[%s140 + $0x200] sm:$0xff]
        %v235 = vld [vmem:[%s140 + $0x208] sm:$0xff]
        %v236 = vld [vmem:[%s140 + $0x210] sm:$0xff]
        %v237 = vld [vmem:[%s140 + $0x218] sm:$0xff]
        %v238 = vld [vmem:[%s140 + $0x220] sm:$0xff]
        %v239 = vld [vmem:[%s140 + $0x228] sm:$0xff]
        %v240 = vld [vmem:[%s140 + $0x230] sm:$0xff]
        %v241 = vld [vmem:[%s140 + $0x238] sm:$0xff]
        %v242 = vld [vmem:[%s140 + $0x240] sm:$0xff]
        %v243 = vld [vmem:[%s140 + $0x248] sm:$0xff]
        %v244 = vld [vmem:[%s140 + $0x250] sm:$0xff]
        %v245 = vld [vmem:[%s140 + $0x258] sm:$0xff]
        %v246 = vld [vmem:[%s140 + $0x260] sm:$0xff]
        %v247 = vld [vmem:[%s140 + $0x268] sm:$0xff]
        %v248 = vld [vmem:[%s140 + $0x270] sm:$0xff]
        %v249 = vld [vmem:[%s140 + $0x278] sm:$0xff]
        %v250 = vld [vmem:[%s140 + $0x280] sm:$0xff]
        %v251 = vld [vmem:[%s140 + $0x288] sm:$0xff]
        %v252 = vld [vmem:[%s140 + $0x290] sm:$0xff]
        %v253 = vld [vmem:[%s140 + $0x298] sm:$0xff]
        %v254 = vld [vmem:[%s140 + $0x2a0] sm:$0xff]
        %v255 = vld [vmem:[%s140 + $0x2a8] sm:$0xff]
        %v256 = vld [vmem:[%s140 + $0x2b0] sm:$0xff]
        %v257 = vld [vmem:[%s140 + $0x2b8] sm:$0xff]
        %v258 = vld [vmem:[%s140 + $0x2c0] sm:$0xff]
        %v259 = vld [vmem:[%s140 + $0x2c8] sm:$0xff]
        %v260 = vld [vmem:[%s140 + $0x2d0] sm:$0xff]
        %v261 = vld [vmem:[%s140 + $0x2d8] sm:$0xff]
        %v262 = vld [vmem:[%s140 + $0x2e0] sm:$0xff]
        %v263 = vld [vmem:[%s140 + $0x2e8] sm:$0xff]
        %v264 = vld [vmem:[%s140 + $0x2f0] sm:$0xff]
        %v265 = vld [vmem:[%s140 + $0x2f8] sm:$0xff]
        %v266 = vld [vmem:[%s140 + $0x300] sm:$0xff]
        %v267 = vld [vmem:[%s140 + $0x308] sm:$0xff]
        %v268 = vmul.f32 %v170, 1.28
        %v269 = vmul.f32 %v171, 1.28
        %v270 = vmul.f32 %v172, 1.28
        %v271 = vmul.f32 %v173, 1.28
        %v272 = vmul.f32 %v174, 1.28
        %v273 = vmul.f32 %v175, 1.28
        %v274 = vmul.f32 %v176, 1.28
        %v275 = vmul.f32 %v177, 1.28
        %v276 = vmul.f32 %v178, 1.28
        %v277 = vmul.f32 %v179, 1.28
        %v278 = vmul.f32 %v180, 1.28
        %v279 = vmul.f32 %v181, 1.28
        %v280 = vmul.f32 %v182, 1.28
        %v281 = vmul.f32 %v183, 1.28
        %v282 = vmul.f32 %v184, 1.28
        %v283 = vmul.f32 %v185, 1.28
        %v284 = vmul.f32 %v186, 1.28
        %v285 = vmul.f32 %v187, 1.28
        %v286 = vmul.f32 %v188, 1.28
        %v287 = vmul.f32 %v189, 1.28
        %v288 = vmul.f32 %v190, 1.28
        %v289 = vmul.f32 %v191, 1.28
        %v290 = vmul.f32 %v192, 1.28
        %v291 = vmul.f32 %v193, 1.28
        %v292 = vmul.f32 %v194, 1.28
        %v293 = vmul.f32 %v195, 1.28
        %v294 = vmul.f32 %v196, 1.28
        %v295 = vmul.f32 %v197, 1.28
        %v296 = vmul.f32 %v198, 1.28
        %v297 = vmul.f32 %v199, 1.28
        %v298 = vmul.f32 %v200, 1.28
        %v299 = vmul.f32 %v201, 1.28
        %v300 = vmul.f32 %v202, 1.28
        %v301 = vmul.f32 %v203, 1.28
        %v302 = vmul.f32 %v204, 1.28
        %v303 = vmul.f32 %v205, 1.28
        %v304 = vmul.f32 %v206, 1.28
        %v305 = vmul.f32 %v207, 1.28
        %v306 = vmul.f32 %v208, 1.28
        %v307 = vmul.f32 %v209, 1.28
        %v308 = vmul.f32 %v210, 1.28
        %v309 = vmul.f32 %v211, 1.28
        %v310 = vmul.f32 %v212, 1.28
        %v311 = vmul.f32 %v213, 1.28
        %v312 = vmul.f32 %v214, 1.28
        %v313 = vmul.f32 %v215, 1.28
        %v314 = vmul.f32 %v216, 1.28
        %v315 = vmul.f32 %v217, 1.28
        %v316 = vmul.f32 %v218, 1.28
        %v317 = vmul.f32 %v219, 1.28
        %v318 = vmul.f32 %v220, 1.28
        %v319 = vmul.f32 %v221, 1.28
        %v320 = vmul.f32 %v222, 1.28
        %v321 = vmul.f32 %v223, 1.28
        %v322 = vmul.f32 %v224, 1.28
        %v323 = vmul.f32 %v225, 1.28
        %v324 = vmul.f32 %v226, 1.28
        %v325 = vmul.f32 %v227, 1.28
        %v326 = vmul.f32 %v228, 1.28
        %v327 = vmul.f32 %v229, 1.28
        %v328 = vmul.f32 %v230, 1.28
        %v329 = vmul.f32 %v231, 1.28
        %v330 = vmul.f32 %v232, 1.28
        %v331 = vmul.f32 %v233, 1.28
        %v332 = vmul.f32 %v234, 1.28
        %v333 = vmul.f32 %v235, 1.28
        %v334 = vmul.f32 %v236, 1.28
        %v335 = vmul.f32 %v237, 1.28
        %v336 = vmul.f32 %v238, 1.28
        %v337 = vmul.f32 %v239, 1.28
        %v338 = vmul.f32 %v240, 1.28
        %v339 = vmul.f32 %v241, 1.28
        %v340 = vmul.f32 %v242, 1.28
        %v341 = vmul.f32 %v243, 1.28
        %v342 = vmul.f32 %v244, 1.28
        %v343 = vmul.f32 %v245, 1.28
        %v344 = vmul.f32 %v246, 1.28
        %v345 = vmul.f32 %v247, 1.28
        %v346 = vmul.f32 %v248, 1.28
        %v347 = vmul.f32 %v249, 1.28
        %v348 = vmul.f32 %v250, 1.28
        %v349 = vmul.f32 %v251, 1.28
        %v350 = vmul.f32 %v252, 1.28
        %v351 = vmul.f32 %v253, 1.28
        %v352 = vmul.f32 %v254, 1.28
        %v353 = vmul.f32 %v255, 1.28
        %v354 = vmul.f32 %v256, 1.28
        %v355 = vmul.f32 %v257, 1.28
        %v356 = vmul.f32 %v258, 1.28
        %v357 = vmul.f32 %v259, 1.28
        %v358 = vmul.f32 %v260, 1.28
        %v359 = vmul.f32 %v261, 1.28
        %v360 = vmul.f32 %v262, 1.28
        %v361 = vmul.f32 %v263, 1.28
        %v362 = vmul.f32 %v264, 1.28
        %v363 = vmul.f32 %v265, 1.28
        %v364 = vmul.f32 %v266, 1.28
        %v365 = vmul.f32 %v267, 1.28
        %366 = vst [vmem:[%s159] sm:$0xff] %v268
        %367 = vst [vmem:[%s159 + $0x8] sm:$0xff] %v269
        %368 = vst [vmem:[%s159 + $0x10] sm:$0xff] %v270
        %369 = vst [vmem:[%s159 + $0x18] sm:$0xff] %v271
        %370 = vst [vmem:[%s159 + $0x20] sm:$0xff] %v272
        %371 = vst [vmem:[%s159 + $0x28] sm:$0xff] %v273
        %372 = vst [vmem:[%s159 + $0x30] sm:$0xff] %v274
        %373 = vst [vmem:[%s159 + $0x38] sm:$0xff] %v275
        %374 = vst [vmem:[%s159 + $0x40] sm:$0xff] %v276
        %375 = vst [vmem:[%s159 + $0x48] sm:$0xff] %v277
        %376 = vst [vmem:[%s159 + $0x50] sm:$0xff] %v278
        %377 = vst [vmem:[%s159 + $0x58] sm:$0xff] %v279
        %378 = vst [vmem:[%s159 + $0x60] sm:$0xff] %v280
        %379 = vst [vmem:[%s159 + $0x68] sm:$0xff] %v281
        %380 = vst [vmem:[%s159 + $0x70] sm:$0xff] %v282
        %381 = vst [vmem:[%s159 + $0x78] sm:$0xff] %v283
        %382 = vst [vmem:[%s159 + $0x80] sm:$0xff] %v284
        %383 = vst [vmem:[%s159 + $0x88] sm:$0xff] %v285
        %384 = vst [vmem:[%s159 + $0x90] sm:$0xff] %v286
        %385 = vst [vmem:[%s159 + $0x98] sm:$0xff] %v287
        %386 = vst [vmem:[%s159 + $0xa0] sm:$0xff] %v288
        %387 = vst [vmem:[%s159 + $0xa8] sm:$0xff] %v289
        %388 = vst [vmem:[%s159 + $0xb0] sm:$0xff] %v290
        %389 = vst [vmem:[%s159 + $0xb8] sm:$0xff] %v291
        %390 = vst [vmem:[%s159 + $0xc0] sm:$0xff] %v292
        %391 = vst [vmem:[%s159 + $0xc8] sm:$0xff] %v293
        %392 = vst [vmem:[%s159 + $0xd0] sm:$0xff] %v294
        %393 = vst [vmem:[%s159 + $0xd8] sm:$0xff] %v295
        %394 = vst [vmem:[%s159 + $0xe0] sm:$0xff] %v296
        %395 = vst [vmem:[%s159 + $0xe8] sm:$0xff] %v297
        %396 = vst [vmem:[%s159 + $0xf0] sm:$0xff] %v298
        %397 = vst [vmem:[%s159 + $0xf8] sm:$0xff] %v299
        %398 = vst [vmem:[%s159 + $0x100] sm:$0xff] %v300
        %399 = vst [vmem:[%s159 + $0x108] sm:$0xff] %v301
        %400 = vst [vmem:[%s159 + $0x110] sm:$0xff] %v302
        %401 = vst [vmem:[%s159 + $0x118] sm:$0xff] %v303
        %402 = vst [vmem:[%s159 + $0x120] sm:$0xff] %v304
        %403 = vst [vmem:[%s159 + $0x128] sm:$0xff] %v305
        %404 = vst [vmem:[%s159 + $0x130] sm:$0xff] %v306
        %405 = vst [vmem:[%s159 + $0x138] sm:$0xff] %v307
        %406 = vst [vmem:[%s159 + $0x140] sm:$0xff] %v308
        %407 = vst [vmem:[%s159 + $0x148] sm:$0xff] %v309
        %408 = vst [vmem:[%s159 + $0x150] sm:$0xff] %v310
        %409 = vst [vmem:[%s159 + $0x158] sm:$0xff] %v311
        %410 = vst [vmem:[%s159 + $0x160] sm:$0xff] %v312
        %411 = vst [vmem:[%s159 + $0x168] sm:$0xff] %v313
        %412 = vst [vmem:[%s159 + $0x170] sm:$0xff] %v314
        %413 = vst [vmem:[%s159 + $0x178] sm:$0xff] %v315
        %414 = vst [vmem:[%s159 + $0x180] sm:$0xff] %v316
        %415 = vst [vmem:[%s159 + $0x188] sm:$0xff] %v317
        %416 = vst [vmem:[%s159 + $0x190] sm:$0xff] %v318
        %417 = vst [vmem:[%s159 + $0x198] sm:$0xff] %v319
        %418 = vst [vmem:[%s159 + $0x1a0] sm:$0xff] %v320
        %419 = vst [vmem:[%s159 + $0x1a8] sm:$0xff] %v321
        %420 = vst [vmem:[%s159 + $0x1b0] sm:$0xff] %v322
        %421 = vst [vmem:[%s159 + $0x1b8] sm:$0xff] %v323
        %422 = vst [vmem:[%s159 + $0x1c0] sm:$0xff] %v324
        %423 = vst [vmem:[%s159 + $0x1c8] sm:$0xff] %v325
        %424 = vst [vmem:[%s159 + $0x1d0] sm:$0xff] %v326
        %425 = vst [vmem:[%s159 + $0x1d8] sm:$0xff] %v327
        %426 = vst [vmem:[%s159 + $0x1e0] sm:$0xff] %v328
        %427 = vst [vmem:[%s159 + $0x1e8] sm:$0xff] %v329
        %428 = vst [vmem:[%s159 + $0x1f0] sm:$0xff] %v330
        %429 = vst [vmem:[%s159 + $0x1f8] sm:$0xff] %v331
        %430 = vst [vmem:[%s159 + $0x200] sm:$0xff] %v332
        %431 = vst [vmem:[%s159 + $0x208] sm:$0xff] %v333
        %432 = vst [vmem:[%s159 + $0x210] sm:$0xff] %v334
        %433 = vst [vmem:[%s159 + $0x218] sm:$0xff] %v335
        %434 = vst [vmem:[%s159 + $0x220] sm:$0xff] %v336
        %435 = vst [vmem:[%s159 + $0x228] sm:$0xff] %v337
        %436 = vst [vmem:[%s159 + $0x230] sm:$0xff] %v338
        %437 = vst [vmem:[%s159 + $0x238] sm:$0xff] %v339
        %438 = vst [vmem:[%s159 + $0x240] sm:$0xff] %v340
        %439 = vst [vmem:[%s159 + $0x248] sm:$0xff] %v341
        %440 = vst [vmem:[%s159 + $0x250] sm:$0xff] %v342
        %441 = vst [vmem:[%s159 + $0x258] sm:$0xff] %v343
        %442 = vst [vmem:[%s159 + $0x260] sm:$0xff] %v344
        %443 = vst [vmem:[%s159 + $0x268] sm:$0xff] %v345
        %444 = vst [vmem:[%s159 + $0x270] sm:$0xff] %v346
        %445 = vst [vmem:[%s159 + $0x278] sm:$0xff] %v347
        %446 = vst [vmem:[%s159 + $0x280] sm:$0xff] %v348
        %447 = vst [vmem:[%s159 + $0x288] sm:$0xff] %v349
        %448 = vst [vmem:[%s159 + $0x290] sm:$0xff] %v350
        %449 = vst [vmem:[%s159 + $0x298] sm:$0xff] %v351
        %450 = vst [vmem:[%s159 + $0x2a0] sm:$0xff] %v352
        %451 = vst [vmem:[%s159 + $0x2a8] sm:$0xff] %v353
        %452 = vst [vmem:[%s159 + $0x2b0] sm:$0xff] %v354
        %453 = vst [vmem:[%s159 + $0x2b8] sm:$0xff] %v355
        %454 = vst [vmem:[%s159 + $0x2c0] sm:$0xff] %v356
        %455 = vst [vmem:[%s159 + $0x2c8] sm:$0xff] %v357
        %456 = vst [vmem:[%s159 + $0x2d0] sm:$0xff] %v358
        %457 = vst [vmem:[%s159 + $0x2d8] sm:$0xff] %v359
        %458 = vst [vmem:[%s159 + $0x2e0] sm:$0xff] %v360
        %459 = vst [vmem:[%s159 + $0x2e8] sm:$0xff] %v361
        %460 = vst [vmem:[%s159 + $0x2f0] sm:$0xff] %v362
        %461 = vst [vmem:[%s159 + $0x2f8] sm:$0xff] %v363
        %462 = vst [vmem:[%s159 + $0x300] sm:$0xff] %v364
        %463 = vst [vmem:[%s159 + $0x308] sm:$0xff] %v365
        %s464 = sand.u32 %s68, 1
        %s465 = scalar_lea.sflag [#allocation4], %s464
        %s466 = sand.u32 %s68, 1
        %s467 = smul.addr %s466, 784
        %s468 = scalar_lea.vmem [#allocation5], %s467
        // Predicated region
        $region29: #{tpu_custom_call.1} parent=23 // pred_check
          %p469 = pneg %p78
        $region30: #{tpu_custom_call.1} parent=23 // pred_check_branch
          %471 = sbr.rel (%p469) target = $region32
        $region31: #{tpu_custom_call.1} parent=23 // pred_region
          %s472 = smul.u32 196, %s23
          %s473 = ssub.s32 782, %s472
          %p474 = scmp.lt.s32.totalorder %s473, 196
          %s475 = scalar_select %p474, %s473, 196
          %s476 = smul.u32 4, %s475
          %s477 = ssub.s32 784, %s476
          %s478 = sshll.u32 %s477, 4
          %479 = vsyncadd %s465, %s478
          %p480 = scmp.ne.s32.totalorder 0, %s476
          %s481 = smul.addr %s22, 782
          %s482 = sadd.s32 %s472, %s481
          %s483 = smul.addr %s482, 4
          %s484 = scalar_lea.hbm %s1, %s483
          %s485 = smul.u32 %s475, 4
          %s486 = sshll.u32 %s485, 4
          %s487 = sshll.u32 %s468, 4
          %s488 = int_to_ptr.vmem [resolvable:$true] %s487
          %s489 = sshll.u32 %s484, 4
          %s490 = int_to_ptr.hbm [resolvable:$true] %s489
          %492 = dma.vmem_to_hbm [thread:$0]  (%p480), %s488, %s486, %s490, %s465
        $region32: #{tpu_custom_call.1} parent=23 // pred_fallthru
          _
      $region24: #{tpu_custom_call.1} parent=5 // pred_fallthru
        _
      %p493 = scmp.le.s32.totalorder 2, %s13
      // Predicated region
      $region33: #{tpu_custom_call.1} parent=5 // pred_check
        %p494 = pneg %p493
      $region34: #{tpu_custom_call.1} parent=5 // pred_check_branch
        %496 = sbr.rel (%p494) target = $region36
      $region35: #{tpu_custom_call.1} parent=5 // pred_region
        %s497 = ssub.s32 %s13, 2
        // Predicated region
        $region37: #{tpu_custom_call.1} parent=35 // pred_check
          %p498 = pneg %p84
        $region38: #{tpu_custom_call.1} parent=35 // pred_check_branch
          %500 = sbr.rel (%p498) target = $region40
        $region39: #{tpu_custom_call.1} parent=35 // pred_region
          %s501 = sand.u32 %s69, 1
          %s502 = scalar_lea.sflag [#allocation4], %s501
          %s503 = sand.u32 %s69, 1
          %s504 = smul.addr %s503, 784
          %s505 = scalar_lea.vmem [#allocation5], %s504
          %507 = dma.done %s502, 12544
        $region40: #{tpu_custom_call.1} parent=35 // pred_fallthru
          _
      $region36: #{tpu_custom_call.1} parent=5 // pred_fallthru
        _
    $region6: #{tpu_custom_call.1} parent=1 // loop_footer
      %s17 = sadd.s32 1, %s13
    $region7: #{tpu_custom_call.1} parent=1 // loop_footer_branch
      %12 = sbr.rel target = $region3
    $region8: #{tpu_custom_call.1} parent=1 // loop_exit
      _
    %508 = vsyncpa [#allocation3], 1
    %s509 = scalar_lea.sflag [#allocation3], 1
    %510 = vsyncpa %s509, 1
    %511 = vsyncpa [#allocation4], 1
    %s512 = scalar_lea.sflag [#allocation4], 1
    %513 = vsyncpa %s512, 1

</llo_original>
